<compile_context>
chip_gen: v6e
topology: v6e:2x2x1
jax: 0.10.0
libtpu: 0.0.40
codegen_flags: <defaults>
</compile_context>

<pallas_src>
import functools

import jax
import jax.numpy as jnp
import numpy as np
from jax.experimental import pallas as pl
from jax.experimental.pallas import tpu as pltpu


def _round_up(x, m):
    return ((x + m - 1) // m) * m


def _addresser_kernel(x_ref, w_ref, b_ref, seg_ref, rexp_ref, o_ref, *,
                      num_heads, d_addresses, d_data):
    """One token-tile of the Addresser forward pass.

    x_ref    : (TM, d_model)                      VMEM
    w_ref    : (d_model, H*Da*Dd + H*Da)          VMEM (fused, Dd-tiled data first)
    b_ref    : (1, H*Da*Dd + H*Da)                VMEM (fused bias)
    seg_ref  : (H*Da, H*Da)   0/1 per-head segment-sum matrix (constant)
    rexp_ref : (H*Da, H*Da*Dd) 0/1 probability expansion matrix (constant)
    o_ref    : (TM, Da*Dd)                        VMEM (lane-dense, 128 wide)
    """
    f32 = jnp.float32
    H, Da, Dd = num_heads, d_addresses, d_data
    mem = Da * Dd
    na = H * Da
    ntile = H * mem

    x = x_ref[...].astype(f32)

    # Single fused projection on the MXU (f32 accumulation) + bias.
    proj = jnp.dot(x, w_ref[...], preferred_element_type=f32) + b_ref[...]
    dtile = proj[:, :ntile]          # (TM, H*Da*Dd)  data, already Dd-tiled
    addr = proj[:, ntile:]           # (TM, H*Da)     address logits

    # ---- softmax over each head's Da logits, vectorized across heads ----
    # Row-wide max upper-bounds every head's max -> stable exp, no lane shuffles.
    m = jnp.max(addr, axis=-1, keepdims=True)
    e = jnp.exp(addr - m)
    # Per-head denominators broadcast back to (TM, H*Da) via one small MXU
    # matmul with the constant 0/1 segment-sum matrix.
    denom = jnp.dot(e, seg_ref[...], preferred_element_type=f32)
    p = e / denom                    # exact normalization (no approx recip)

    # ---- full-width accumulation of the per-head outer products ----
    # rexp expands probabilities: p_exp[:, h*mem + a*Dd + d] = p[:, h*Da + a]
    p_exp = jnp.dot(p, rexp_ref[...], preferred_element_type=f32)  # (TM, H*mem)

    tm = o_ref.shape[0]
    acc = jnp.zeros((tm, mem), f32)
    for h in range(H):
        acc = acc + (p_exp[:, h * mem:(h + 1) * mem] *
                     dtile[:, h * mem:(h + 1) * mem])   # full-width VPU FMA

    # Single lane-dense store (Da*Dd == 128).
    o_ref[...] = acc.astype(o_ref.dtype)


def addresser_forward(x, wa, ba, wd, bd, *, num_heads, d_addresses, d_data,
                      tile_m=2048):
    """x: (..., d_model) -> (..., d_addresses * d_data)."""
    lead = x.shape[:-1]
    d_model = x.shape[-1]
    n_tokens = int(np.prod(lead)) if lead else 1

    H, Da, Dd = num_heads, d_addresses, d_data
    mem = Da * Dd
    na = H * Da
    ntile = H * mem

    # ---- fold the Dd-tiling into the data projection weights (offline) ----
    # wd_tiled[:, h*mem + a*Dd + d] = wd[:, h*Dd + d]
    wd_tiled = jnp.broadcast_to(
        wd.reshape(d_model, H, 1, Dd), (d_model, H, Da, Dd)
    ).reshape(d_model, ntile)
    bd_tiled = jnp.broadcast_to(
        bd.reshape(1, H, 1, Dd), (1, H, Da, Dd)
    ).reshape(1, ntile)

    # Fused projection (tiled-data block first so all slices are 128-aligned).
    w = jnp.concatenate([wd_tiled, wa], axis=1).astype(jnp.float32)
    b = jnp.concatenate([bd_tiled, ba], axis=1).astype(jnp.float32)
    n_out = ntile + na

    # ---- constant 0/1 helper matrices (hoisted out of the kernel) ----
    idx = np.arange(na)
    seg_np = (idx[:, None] // Da == idx[None, :] // Da).astype(np.float32)
    cols = np.arange(ntile)
    col_head = cols // mem
    col_addr = (cols % mem) // Dd
    rexp_np = (idx[:, None] == (col_head * Da + col_addr)[None, :]
               ).astype(np.float32)
    seg = jnp.asarray(seg_np)
    rexp = jnp.asarray(rexp_np)

    # ---- tiling: large token tiles, ragged last block handled by Pallas ----
    # (For very large inputs on v7x the cdiv grid gives >=2 steps so the
    #  "parallel" axis shards across both TensorCores.)
    tm = max(8, min(int(tile_m), _round_up(n_tokens, 8)))
    tm = _round_up(tm, 8)
    grid = pl.cdiv(n_tokens, tm)

    # No wrapper-side pad / dtype cast: keep x in native dtype, cast in-kernel.
    x2 = x.reshape(n_tokens, d_model)

    kernel = functools.partial(
        _addresser_kernel,
        num_heads=num_heads, d_addresses=d_addresses, d_data=d_data)

    out = pl.pallas_call(
        kernel,
        out_shape=jax.ShapeDtypeStruct((n_tokens, mem), x.dtype),
        grid_spec=pltpu.PrefetchScalarGridSpec(
            num_scalar_prefetch=0,
            grid=(grid,),
            in_specs=[
                pl.BlockSpec((tm, d_model), lambda i: (i, 0)),
                pl.BlockSpec((d_model, n_out), lambda i: (0, 0)),
                pl.BlockSpec((1, n_out), lambda i: (0, 0)),
                pl.BlockSpec((na, na), lambda i: (0, 0)),
                pl.BlockSpec((na, ntile), lambda i: (0, 0)),
            ],
            out_specs=pl.BlockSpec((tm, mem), lambda i: (i, 0)),
        ),
        compiler_params=pltpu.CompilerParams(
            dimension_semantics=("parallel",),
            vmem_limit_bytes=32 * 1024 * 1024),
    )(x2, w, b, seg, rexp)

    return out.reshape(*lead, mem)


def _reference(x, wa, ba, wd, bd, *, num_heads, d_addresses, d_data):
    """Pure-JAX reference matching the PyTorch module."""
    lead = x.shape[:-1]
    addr = (x @ wa + ba[0]).reshape(*lead, num_heads, d_addresses)
    addr = jax.nn.softmax(addr, axis=-1)
    data = (x @ wd + bd[0]).reshape(*lead, num_heads, d_data)
    memv = addr[..., :, :, None] * data[..., :, None, :]
    memv = memv.reshape(*lead, num_heads, d_addresses * d_data)
    return memv.sum(axis=-2)


if __name__ == "__main__":
    # Small config consistent with the module: d_model=32, H=4, Da=8, Dd=16.
    d_model, num_heads, d_addresses, d_data = 32, 4, 8, 16

    key = jax.random.PRNGKey(0)
    kx, kwa, kba, kwd, kbd, kx2 = jax.random.split(key, 6)

    # Deterministic param init (PyTorch Linear-style uniform bound 1/sqrt(in)).
    bound = 1.0 / np.sqrt(d_model)
    # Stored already transposed relative to torch: (d_model, out_features).
    wa = jax.random.uniform(kwa, (d_model, num_heads * d_addresses),
                            jnp.float32, -bound, bound)
    ba = jax.random.uniform(kba, (1, num_heads * d_addresses),
                            jnp.float32, -bound, bound)
    wd = jax.random.uniform(kwd, (d_model, num_heads * d_data),
                            jnp.float32, -bound, bound)
    bd = jax.random.uniform(kbd, (1, num_heads * d_data),
                            jnp.float32, -bound, bound)

    # Case 1: small batch/seq (single tile).
    batch, seq = 2, 8
    x = jax.random.normal(kx, (batch, seq, d_model), jnp.float32)
    out = addresser_forward(
        x, wa, ba, wd, bd,
        num_heads=num_heads, d_addresses=d_addresses, d_data=d_data)
    out = jax.block_until_ready(out)
    ref = _reference(
        x, wa, ba, wd, bd,
        num_heads=num_heads, d_addresses=d_addresses, d_data=d_data)
    assert out.shape == (batch, seq, d_addresses * d_data)
    np.testing.assert_allclose(np.asarray(out), np.asarray(ref),
                               rtol=1e-3, atol=1e-3)

    # Case 2: larger token count (exercises the cdiv grid / tile capping).
    batch2, seq2 = 4, 300
    x2 = jax.random.normal(kx2, (batch2, seq2, d_model), jnp.float32)
    out2 = addresser_forward(
        x2, wa, ba, wd, bd,
        num_heads=num_heads, d_addresses=d_addresses, d_data=d_data)
    out2 = jax.block_until_ready(out2)
    ref2 = _reference(
        x2, wa, ba, wd, bd,
        num_heads=num_heads, d_addresses=d_addresses, d_data=d_data)
    assert out2.shape == (batch2, seq2, d_addresses * d_data)
    np.testing.assert_allclose(np.asarray(out2), np.asarray(ref2),
                               rtol=1e-3, atol=1e-3)

    print("KERNEL_OK")
</pallas_src>

<mosaic_0001>
module attributes {stable_mosaic.version = 11 : i64} {
  func.func @_addresser_kernel(%arg0: i32, %arg1: memref<16x32xf32, #tpu.memory_space<vmem>>, %arg2: memref<32x544xf32, #tpu.memory_space<vmem>>, %arg3: memref<1x544xf32, #tpu.memory_space<vmem>>, %arg4: memref<32x32xf32, #tpu.memory_space<vmem>>, %arg5: memref<32x512xf32, #tpu.memory_space<vmem>>, %arg6: memref<16x128xf32, #tpu.memory_space<vmem>>) attributes {dimension_semantics = [#tpu.dimension_semantics<parallel>], iteration_bounds = array<i64: 1>, scalar_prefetch = 0 : i64, scratch_operands = 0 : i64, tpu.core_type = #tpu.core_type<tc>, window_params = [{transform_indices = @transform_0, window_bounds = array<i64: 16, 32>}, {pipeline_mode = #tpu.pipeline_mode<synchronous>, transform_indices = @transform_1, window_bounds = array<i64: 32, 544>}, {pipeline_mode = #tpu.pipeline_mode<synchronous>, transform_indices = @transform_2, window_bounds = array<i64: 1, 544>}, {pipeline_mode = #tpu.pipeline_mode<synchronous>, transform_indices = @transform_3, window_bounds = array<i64: 32, 32>}, {pipeline_mode = #tpu.pipeline_mode<synchronous>, transform_indices = @transform_4, window_bounds = array<i64: 32, 512>}, {transform_indices = @transform_5, window_bounds = array<i64: 16, 128>}]} {
    %c0 = arith.constant 0 : index
    %c0_0 = arith.constant 0 : index
    %0 = vector.load %arg1[%c0, %c0_0] : memref<16x32xf32, #tpu.memory_space<vmem>>, vector<16x32xf32>
    %c0_1 = arith.constant 0 : index
    %c0_2 = arith.constant 0 : index
    %1 = vector.load %arg2[%c0_1, %c0_2] : memref<32x544xf32, #tpu.memory_space<vmem>>, vector<32x544xf32>
    %cst = arith.constant dense<0.000000e+00> : vector<16x544xf32>
    %2 = tpu.matmul %0, %1, %cst {dimension_numbers = #tpu.dot_dimension_numbers<[1], [0], [0], [1], [0, 0, 1, 1], [], []>} : vector<16x32xf32>, vector<32x544xf32>, vector<16x544xf32> -> vector<16x544xf32>
    %c0_3 = arith.constant 0 : index
    %c0_4 = arith.constant 0 : index
    %3 = vector.load %arg3[%c0_3, %c0_4] : memref<1x544xf32, #tpu.memory_space<vmem>>, vector<1x544xf32>
    %4 = vector.broadcast %3 : vector<1x544xf32> to vector<16x544xf32>
    %5 = arith.addf %2, %4 : vector<16x544xf32>
    %6 = vector.extract_strided_slice %5 {offsets = [0, 0], sizes = [16, 512], strides = [1, 1]} : vector<16x544xf32> to vector<16x512xf32>
    %7 = vector.extract_strided_slice %5 {offsets = [0, 512], sizes = [16, 32], strides = [1, 1]} : vector<16x544xf32> to vector<16x32xf32>
    %cst_5 = arith.constant dense<0xFF800000> : vector<16xf32>
    %8 = vector.multi_reduction <maximumf>, %7, %cst_5 [1] : vector<16x32xf32> to vector<16xf32>
    %9 = vector.shape_cast %8 : vector<16xf32> to vector<16x1xf32>
    %10 = vector.broadcast %9 : vector<16x1xf32> to vector<16x32xf32>
    %11 = arith.subf %7, %10 : vector<16x32xf32>
    %12 = math.exp %11 : vector<16x32xf32>
    %c0_6 = arith.constant 0 : index
    %c0_7 = arith.constant 0 : index
    %13 = vector.load %arg4[%c0_6, %c0_7] : memref<32x32xf32, #tpu.memory_space<vmem>>, vector<32x32xf32>
    %cst_8 = arith.constant dense<0.000000e+00> : vector<16x32xf32>
    %14 = tpu.matmul %12, %13, %cst_8 {dimension_numbers = #tpu.dot_dimension_numbers<[1], [0], [0], [1], [0, 0, 1, 1], [], []>} : vector<16x32xf32>, vector<32x32xf32>, vector<16x32xf32> -> vector<16x32xf32>
    %15 = arith.divf %12, %14 : vector<16x32xf32>
    %c0_9 = arith.constant 0 : index
    %c0_10 = arith.constant 0 : index
    %16 = vector.load %arg5[%c0_9, %c0_10] : memref<32x512xf32, #tpu.memory_space<vmem>>, vector<32x512xf32>
    %cst_11 = arith.constant dense<0.000000e+00> : vector<16x512xf32>
    %17 = tpu.matmul %15, %16, %cst_11 {dimension_numbers = #tpu.dot_dimension_numbers<[1], [0], [0], [1], [0, 0, 1, 1], [], []>} : vector<16x32xf32>, vector<32x512xf32>, vector<16x512xf32> -> vector<16x512xf32>
    %cst_12 = arith.constant 0.000000e+00 : f32
    %18 = vector.broadcast %cst_12 : f32 to vector<16x128xf32>
    %19 = vector.extract_strided_slice %17 {offsets = [0, 0], sizes = [16, 128], strides = [1, 1]} : vector<16x512xf32> to vector<16x128xf32>
    %20 = vector.extract_strided_slice %6 {offsets = [0, 0], sizes = [16, 128], strides = [1, 1]} : vector<16x512xf32> to vector<16x128xf32>
    %21 = arith.mulf %19, %20 : vector<16x128xf32>
    %22 = arith.addf %18, %21 : vector<16x128xf32>
    %23 = vector.extract_strided_slice %17 {offsets = [0, 128], sizes = [16, 128], strides = [1, 1]} : vector<16x512xf32> to vector<16x128xf32>
    %24 = vector.extract_strided_slice %6 {offsets = [0, 128], sizes = [16, 128], strides = [1, 1]} : vector<16x512xf32> to vector<16x128xf32>
    %25 = arith.mulf %23, %24 : vector<16x128xf32>
    %26 = arith.addf %22, %25 : vector<16x128xf32>
    %27 = vector.extract_strided_slice %17 {offsets = [0, 256], sizes = [16, 128], strides = [1, 1]} : vector<16x512xf32> to vector<16x128xf32>
    %28 = vector.extract_strided_slice %6 {offsets = [0, 256], sizes = [16, 128], strides = [1, 1]} : vector<16x512xf32> to vector<16x128xf32>
    %29 = arith.mulf %27, %28 : vector<16x128xf32>
    %30 = arith.addf %26, %29 : vector<16x128xf32>
    %31 = vector.extract_strided_slice %17 {offsets = [0, 384], sizes = [16, 128], strides = [1, 1]} : vector<16x512xf32> to vector<16x128xf32>
    %32 = vector.extract_strided_slice %6 {offsets = [0, 384], sizes = [16, 128], strides = [1, 1]} : vector<16x512xf32> to vector<16x128xf32>
    %33 = arith.mulf %31, %32 : vector<16x128xf32>
    %34 = arith.addf %30, %33 : vector<16x128xf32>
    %c0_13 = arith.constant 0 : index
    %c0_14 = arith.constant 0 : index
    %35 = vector.load %arg6[%c0_13, %c0_14] : memref<16x128xf32, #tpu.memory_space<vmem>>, vector<16x128xf32>
    tpu.vector_store %arg6[%c0_13, %c0_14], %34 {strides = array<i32>} : memref<16x128xf32, #tpu.memory_space<vmem>>, vector<16x128xf32>,
    return
  }
  func.func @transform_0(%arg0: i32) -> (i32, i32) {
    %c0_i32 = arith.constant 0 : i32
    %c0_i32_0 = arith.constant 0 : i32
    return %arg0, %c0_i32 : i32, i32
  }
  func.func @transform_1(%arg0: i32) -> (i32, i32) {
    %c0_i32 = arith.constant 0 : i32
    %c0_i32_0 = arith.constant 0 : i32
    %c0_i32_1 = arith.constant 0 : i32
    return %c0_i32, %c0_i32_0 : i32, i32
  }
  func.func @transform_2(%arg0: i32) -> (i32, i32) {
    %c0_i32 = arith.constant 0 : i32
    %c0_i32_0 = arith.constant 0 : i32
    %c0_i32_1 = arith.constant 0 : i32
    return %c0_i32, %c0_i32_0 : i32, i32
  }
  func.func @transform_3(%arg0: i32) -> (i32, i32) {
    %c0_i32 = arith.constant 0 : i32
    %c0_i32_0 = arith.constant 0 : i32
    %c0_i32_1 = arith.constant 0 : i32
    return %c0_i32, %c0_i32_0 : i32, i32
  }
  func.func @transform_4(%arg0: i32) -> (i32, i32) {
    %c0_i32 = arith.constant 0 : i32
    %c0_i32_0 = arith.constant 0 : i32
    %c0_i32_1 = arith.constant 0 : i32
    return %c0_i32, %c0_i32_0 : i32, i32
  }
  func.func @transform_5(%arg0: i32) -> (i32, i32) {
    %c0_i32 = arith.constant 0 : i32
    %c0_i32_0 = arith.constant 0 : i32
    return %arg0, %c0_i32 : i32, i32
  }
}

</mosaic_0001>

<llo_original>
// kernel: tpu_custom_call.1
$region0: #{tpu_custom_call.1}
  #allocation0 [shape = 'u32[]', space=smem, size = 0x4, offset = 0x4, fixed_abs, tag = 'smem constant byte address 0x4 - core index']
  #allocation1 [shape = 'u32[144,128]{1,0:T(1,128)}', space=vmem, size = 0x12000, scoped, tag = 'internal scratch']
  %s0 = inlined_call_operand.hbm [shape: f32[16,32], index: 0, kind: input, shape index: {}]
  %s1 = inlined_call_operand.hbm [shape: f32[32,544], index: 1, kind: input, shape index: {}]
  %s2 = inlined_call_operand.hbm [shape: f32[1,544], index: 2, kind: input, shape index: {}]
  %s3 = inlined_call_operand.hbm [shape: f32[32,32], index: 3, kind: input, shape index: {}]
  %s4 = inlined_call_operand.hbm [shape: f32[32,512], index: 4, kind: input, shape index: {}]
  %s5 = inlined_call_operand.hbm [shape: f32[16,128], index: 5, kind: output, shape index: {}]
  %s6 = sld [smem:[#allocation0]]
  $region50: #{tpu_custom_call.1} parent=0
    _
  %s8 = ssub.s32 1, %s6
  %s9 = scalar_select 0, %s8, %s6
  $region1: #{tpu_custom_call.1} parent=0
    #allocation2 [shape = 'u8[8192]{0}', space=vmem, size = 0x2000, scoped, tag = 'input window, operand 0, single buffered']
    #allocation3 [shape = 's32[1]{0}', space=sflag, size = 0x4, scoped, tag = 'scoped memory for tpu_custom_call.1']
    #allocation4 [shape = 's32[1]{0}', space=sflag, size = 0x4, scoped, tag = 'scoped memory for tpu_custom_call.1']
    #allocation5 [shape = 'u8[81920]{0}', space=vmem, size = 0x14000, scoped, tag = 'input window, operand 1, single buffered']
    #allocation6 [shape = 's32[1]{0}', space=sflag, size = 0x4, scoped, tag = 'scoped memory for tpu_custom_call.1']
    #allocation7 [shape = 'u8[2560]{0}', space=vmem, size = 0xc00, scoped, tag = 'input window, operand 2, single buffered']
    #allocation8 [shape = 'u8[16384]{0}', space=vmem, size = 0x4000, scoped, tag = 'input window, operand 3, single buffered']
    #allocation9 [shape = 's32[1]{0}', space=sflag, size = 0x4, scoped, tag = 'scoped memory for tpu_custom_call.1']
    #allocation10 [shape = 'u8[65536]{0}', space=vmem, size = 0x10000, scoped, tag = 'input window, operand 4, single buffered']
    #allocation11 [shape = 'u8[8192]{0}', space=vmem, size = 0x2000, scoped, tag = 'output window, operand 0, single buffered']
    %10 = vsyncpa [#allocation3], 0
    %11 = vsyncpa [#allocation6], 0
    %12 = vsyncpa [#allocation9], 0
    %13 = vsyncpa [#allocation4], 0
    // Predicated region
    $region2: #{tpu_custom_call.1} parent=1 // pred_check
      _
    $region3: #{tpu_custom_call.1} parent=1 // pred_check_branch
      %15 = sbr.rel (0) target = $region5
    $region4: #{tpu_custom_call.1} parent=1 // pred_region
      %s17 = ssub.s32 256, 256
      %18 = vsyncadd [#allocation3], %s17
      %s19 = sshll.u32 [#allocation2], 4
      %s20 = int_to_ptr.vmem [resolvable:$true] %s19
      %25 = dma.hbm_to_vmem [thread:$0]  %s0, 256, %s20, [#allocation3], 128, 128, 8
    $region5: #{tpu_custom_call.1} parent=1 // pred_fallthru
      _
    // Predicated region
    $region6: #{tpu_custom_call.1} parent=1 // pred_check
      _
    $region7: #{tpu_custom_call.1} parent=1 // pred_check_branch
      %27 = sbr.rel (0) target = $region9
    $region8: #{tpu_custom_call.1} parent=1 // pred_region
      %s29 = ssub.s32 2560, 2560
      %30 = vsyncadd [#allocation6], %s29
      %s31 = sshll.u32 [#allocation5], 4
      %s32 = int_to_ptr.vmem [resolvable:$true] %s31
      %37 = dma.hbm_to_vmem [thread:$0]  %s1, 2560, %s32, [#allocation6], 640, 640, 40
    $region9: #{tpu_custom_call.1} parent=1 // pred_fallthru
      _
    // Predicated region
    $region10: #{tpu_custom_call.1} parent=1 // pred_check
      _
    $region11: #{tpu_custom_call.1} parent=1 // pred_check_branch
      %39 = sbr.rel (0) target = $region13
    $region12: #{tpu_custom_call.1} parent=1 // pred_region
      %s41 = ssub.s32 80, 80
      %42 = vsyncadd [#allocation6], %s41
      %s44 = sshll.u32 [#allocation7], 4
      %s45 = int_to_ptr.vmem [resolvable:$true] %s44
      %47 = dma.hbm_to_vmem [thread:$0]  %s2, 80, %s45, [#allocation6]
    $region13: #{tpu_custom_call.1} parent=1 // pred_fallthru
      _
    // Predicated region
    $region14: #{tpu_custom_call.1} parent=1 // pred_check
      _
    $region15: #{tpu_custom_call.1} parent=1 // pred_check_branch
      %49 = sbr.rel (0) target = $region17
    $region16: #{tpu_custom_call.1} parent=1 // pred_region
      %s51 = ssub.s32 512, 512
      %52 = vsyncadd [#allocation9], %s51
      %s53 = sshll.u32 [#allocation8], 4
      %s54 = int_to_ptr.vmem [resolvable:$true] %s53
      %59 = dma.hbm_to_vmem [thread:$0]  %s3, 512, %s54, [#allocation9], 128, 128, 8
    $region17: #{tpu_custom_call.1} parent=1 // pred_fallthru
      _
    // Predicated region
    $region18: #{tpu_custom_call.1} parent=1 // pred_check
      _
    $region19: #{tpu_custom_call.1} parent=1 // pred_check_branch
      %61 = sbr.rel (0) target = $region21
    $region20: #{tpu_custom_call.1} parent=1 // pred_region
      %s63 = ssub.s32 2048, 2048
      %64 = vsyncadd [#allocation9], %s63
      %s65 = sshll.u32 [#allocation10], 4
      %s66 = int_to_ptr.vmem [resolvable:$true] %s65
      %71 = dma.hbm_to_vmem [thread:$0]  %s4, 2048, %s66, [#allocation9], 512, 512, 32
    $region21: #{tpu_custom_call.1} parent=1 // pred_fallthru
      _
    // Predicated region
    $region22: #{tpu_custom_call.1} parent=1 // pred_check
      _
    $region23: #{tpu_custom_call.1} parent=1 // pred_check_branch
      %73 = sbr.rel (0) target = $region25
    $region24: #{tpu_custom_call.1} parent=1 // pred_region
      %74 = dma.done [#allocation3], 256
    $region25: #{tpu_custom_call.1} parent=1 // pred_fallthru
      _
    // Predicated region
    $region26: #{tpu_custom_call.1} parent=1 // pred_check
      _
    $region27: #{tpu_custom_call.1} parent=1 // pred_check_branch
      %76 = sbr.rel (0) target = $region29
    $region28: #{tpu_custom_call.1} parent=1 // pred_region
      %77 = dma.done [#allocation6], 2560
    $region29: #{tpu_custom_call.1} parent=1 // pred_fallthru
      _
    // Predicated region
    $region30: #{tpu_custom_call.1} parent=1 // pred_check
      _
    $region31: #{tpu_custom_call.1} parent=1 // pred_check_branch
      %79 = sbr.rel (0) target = $region33
    $region32: #{tpu_custom_call.1} parent=1 // pred_region
      %80 = dma.done [#allocation6], 80
    $region33: #{tpu_custom_call.1} parent=1 // pred_fallthru
      _
    // Predicated region
    $region34: #{tpu_custom_call.1} parent=1 // pred_check
      _
    $region35: #{tpu_custom_call.1} parent=1 // pred_check_branch
      %82 = sbr.rel (0) target = $region37
    $region36: #{tpu_custom_call.1} parent=1 // pred_region
      %83 = dma.done [#allocation9], 512
    $region37: #{tpu_custom_call.1} parent=1 // pred_fallthru
      _
    // Predicated region
    $region38: #{tpu_custom_call.1} parent=1 // pred_check
      _
    $region39: #{tpu_custom_call.1} parent=1 // pred_check_branch
      %85 = sbr.rel (0) target = $region41
    $region40: #{tpu_custom_call.1} parent=1 // pred_region
      %86 = dma.done [#allocation9], 2048
    $region41: #{tpu_custom_call.1} parent=1 // pred_fallthru
      _
    %v87 = vld [vmem:[#allocation2] sm:$0xff]
    %v88 = vld [vmem:[#allocation2 + $0x8] sm:$0xff]
    %v89 = vld [vmem:[#allocation5] sm:$0xff]
    %v90 = vld [vmem:[#allocation5 + $0x8] sm:$0xff]
    %v91 = vld [vmem:[#allocation5 + $0x10] sm:$0xff]
    %v92 = vld [vmem:[#allocation5 + $0x18] sm:$0xff]
    %v93 = vld [vmem:[#allocation5 + $0x20] sm:$0xff]
    %v94 = vld [vmem:[#allocation5 + $0x28] sm:$0xff]
    %v95 = vld [vmem:[#allocation5 + $0x30] sm:$0xff]
    %v96 = vld [vmem:[#allocation5 + $0x38] sm:$0xff]
    %v97 = vld [vmem:[#allocation5 + $0x40] sm:$0xff]
    %v98 = vld [vmem:[#allocation5 + $0x48] sm:$0xff]
    %v99 = vld [vmem:[#allocation5 + $0x50] sm:$0xff]
    %v100 = vld [vmem:[#allocation5 + $0x58] sm:$0xff]
    %v101 = vld [vmem:[#allocation5 + $0x60] sm:$0xff]
    %v102 = vld [vmem:[#allocation5 + $0x68] sm:$0xff]
    %v103 = vld [vmem:[#allocation5 + $0x70] sm:$0xff]
    %v104 = vld [vmem:[#allocation5 + $0x78] sm:$0xff]
    %v105 = vld [vmem:[#allocation5 + $0x80] sm:$0xff]
    %v106 = vld [vmem:[#allocation5 + $0x88] sm:$0xff]
    %v107 = vld [vmem:[#allocation5 + $0x90] sm:$0xff]
    %v108 = vld [vmem:[#allocation5 + $0x98] sm:$0xff]
    %v109 = vld [vmem:[#allocation7] sm:$0x1f]
    %v111 = vlaneseq
    %v112 = vshrl.u32 %v111, 7
    %v113 = vsub.s32 0, %v112
    %v114 = vrot.slane %v109, %v113
    %v115 = vlaneseq
    %v116 = vshrl.u32 %v115, 7
    %v117 = vsub.s32 1, %v116
    %v118 = vrot.slane %v109, %v117
    %v119 = vlaneseq
    %v120 = vshrl.u32 %v119, 7
    %v121 = vsub.s32 2, %v120
    %v122 = vrot.slane %v109, %v121
    %v123 = vlaneseq
    %v124 = vshrl.u32 %v123, 7
    %v125 = vsub.s32 3, %v124
    %v126 = vrot.slane %v109, %v125
    %v127 = vlaneseq
    %v128 = vshrl.u32 %v127, 7
    %v129 = vsub.s32 4, %v128
    %v130 = vrot.slane %v109, %v129
    %vm136 = vcmask 261120
    %v138 = vsel %vm136, %v87, 0
    %v141 = vsel %vm136, %v88, 0
    %143 = vmatprep.subr.mxu0 0.0
    %144 = vmatpush1.msra.mxu0 0.0
    %145 = vmatprep.subr.mxu0 0.0
    %146 = vmatpush1.msra.mxu0 0.0
    %147 = vmatprep.subr.mxu0 0.0
    %148 = vmatpush1.msra.mxu0 0.0
    %149 = vmatprep.subr.mxu0 0.0
    %150 = vmatpush1.msra.mxu0 0.0
    %151 = vmatprep.subr.mxu0 0.0
    %152 = vmatpush1.msra.mxu0 0.0
    %153 = vmatprep.subr.mxu0 0.0
    %154 = vmatpush1.msra.mxu0 0.0
    %155 = vmatprep.subr.mxu0 0.0
    %156 = vmatpush1.msra.mxu0 0.0
    %157 = vmatprep.subr.mxu0 0.0
    %158 = vmatpush1.msra.mxu0 0.0
    %159 = vmatprep.subr.mxu0 0.0
    %160 = vmatpush1.msra.mxu0 0.0
    %161 = vmatprep.subr.mxu0 0.0
    %162 = vmatpush1.msra.mxu0 0.0
    %163 = vmatprep.subr.mxu0 0.0
    %164 = vmatpush1.msra.mxu0 0.0
    %165 = vmatprep.subr.mxu0 0.0
    %166 = vmatpush1.msra.mxu0 0.0
    %167 = vmatprep.subr.mxu0 %v105
    %168 = vmatpush1.msra.mxu0 %v104
    %169 = vmatprep.subr.mxu0 %v100
    %170 = vmatpush1.msra.mxu0 %v99
    %171 = vmatprep.subr.mxu0 %v95
    %172 = vmatpush1.msra.mxu0 %v94
    %173 = vmatprep.subr.mxu0 %v90
    %174 = vmatpush1.msra.mxu0 %v89
    %175 = vmatprep.subr.mxu0 0.0
    %176 = vmatpush2.msra.mxu0 0.0
    %177 = vmatprep.subr.mxu0 0.0
    %178 = vmatpush2.msra.mxu0 0.0
    %179 = vmatprep.subr.mxu0 0.0
    %180 = vmatpush2.msra.mxu0 0.0
    %181 = vmatprep.subr.mxu0 0.0
    %182 = vmatpush2.msra.mxu0 0.0
    %183 = vmatprep.subr.mxu0 0.0
    %184 = vmatpush2.msra.mxu0 0.0
    %185 = vmatprep.subr.mxu0 0.0
    %186 = vmatpush2.msra.mxu0 0.0
    %187 = vmatprep.subr.mxu0 0.0
    %188 = vmatpush2.msra.mxu0 0.0
    %189 = vmatprep.subr.mxu0 0.0
    %190 = vmatpush2.msra.mxu0 0.0
    %191 = vmatprep.subr.mxu0 0.0
    %192 = vmatpush2.msra.mxu0 0.0
    %193 = vmatprep.subr.mxu0 0.0
    %194 = vmatpush2.msra.mxu0 0.0
    %195 = vmatprep.subr.mxu0 0.0
    %196 = vmatpush2.msra.mxu0 0.0
    %197 = vmatprep.subr.mxu0 0.0
    %198 = vmatpush2.msra.mxu0 0.0
    %199 = vmatprep.subr.mxu0 0.0
    %200 = vmatpush2.msra.mxu0 0.0
    %201 = vmatprep.subr.mxu0 0.0
    %202 = vmatpush2.msra.mxu0 0.0
    %203 = vmatprep.subr.mxu0 0.0
    %204 = vmatpush2.msra.mxu0 0.0
    %205 = vmatprep.subr.mxu0 0.0
    %206 = vmatpush2.msra.mxu0 0.0
    %207 = vmatprep.mubr.f32.mxu0 0.0
    %208 = vmatmul.mubr.f32.gmra.mxu0 %v138
    %v209 = vpop.f32.mrf.mxu0
    %v210 = vadd.f32 %v114, %v209
    %v211 = vpop.f32.mrf.mxu0
    %v212 = vadd.f32 %v118, %v211
    %213 = vmatprep.mubr.f32.mxu0 0.0
    %214 = vmatmul.mubr.f32.gmra.mxu0 %v141
    %v215 = vpop.f32.mrf.mxu0
    %v216 = vadd.f32 %v114, %v215
    %v217 = vpop.f32.mrf.mxu0
    %v218 = vadd.f32 %v118, %v217
    %219 = vdwg.mxu0
    %220 = vmatprep.subr.mxu0 0.0
    %221 = vmatpush1.msra.mxu0 0.0
    %222 = vmatprep.subr.mxu0 0.0
    %223 = vmatpush1.msra.mxu0 0.0
    %224 = vmatprep.subr.mxu0 0.0
    %225 = vmatpush1.msra.mxu0 0.0
    %226 = vmatprep.subr.mxu0 0.0
    %227 = vmatpush1.msra.mxu0 0.0
    %228 = vmatprep.subr.mxu0 0.0
    %229 = vmatpush1.msra.mxu0 0.0
    %230 = vmatprep.subr.mxu0 0.0
    %231 = vmatpush1.msra.mxu0 0.0
    %232 = vmatprep.subr.mxu0 0.0
    %233 = vmatpush1.msra.mxu0 0.0
    %234 = vmatprep.subr.mxu0 0.0
    %235 = vmatpush1.msra.mxu0 0.0
    %236 = vmatprep.subr.mxu0 0.0
    %237 = vmatpush1.msra.mxu0 0.0
    %238 = vmatprep.subr.mxu0 0.0
    %239 = vmatpush1.msra.mxu0 0.0
    %240 = vmatprep.subr.mxu0 0.0
    %241 = vmatpush1.msra.mxu0 0.0
    %242 = vmatprep.subr.mxu0 0.0
    %243 = vmatpush1.msra.mxu0 0.0
    %244 = vmatprep.subr.mxu0 %v107
    %245 = vmatpush1.msra.mxu0 %v106
    %246 = vmatprep.subr.mxu0 %v102
    %247 = vmatpush1.msra.mxu0 %v101
    %248 = vmatprep.subr.mxu0 %v97
    %249 = vmatpush1.msra.mxu0 %v96
    %250 = vmatprep.subr.mxu0 %v92
    %251 = vmatpush1.msra.mxu0 %v91
    %252 = vmatprep.subr.mxu0 0.0
    %253 = vmatpush2.msra.mxu0 0.0
    %254 = vmatprep.subr.mxu0 0.0
    %255 = vmatpush2.msra.mxu0 0.0
    %256 = vmatprep.subr.mxu0 0.0
    %257 = vmatpush2.msra.mxu0 0.0
    %258 = vmatprep.subr.mxu0 0.0
    %259 = vmatpush2.msra.mxu0 0.0
    %260 = vmatprep.subr.mxu0 0.0
    %261 = vmatpush2.msra.mxu0 0.0
    %262 = vmatprep.subr.mxu0 0.0
    %263 = vmatpush2.msra.mxu0 0.0
    %264 = vmatprep.subr.mxu0 0.0
    %265 = vmatpush2.msra.mxu0 0.0
    %266 = vmatprep.subr.mxu0 0.0
    %267 = vmatpush2.msra.mxu0 0.0
    %268 = vmatprep.subr.mxu0 0.0
    %269 = vmatpush2.msra.mxu0 0.0
    %270 = vmatprep.subr.mxu0 0.0
    %271 = vmatpush2.msra.mxu0 0.0
    %272 = vmatprep.subr.mxu0 0.0
    %273 = vmatpush2.msra.mxu0 0.0
    %274 = vmatprep.subr.mxu0 0.0
    %275 = vmatpush2.msra.mxu0 0.0
    %276 = vmatprep.subr.mxu0 0.0
    %277 = vmatpush2.msra.mxu0 0.0
    %278 = vmatprep.subr.mxu0 0.0
    %279 = vmatpush2.msra.mxu0 0.0
    %280 = vmatprep.subr.mxu0 0.0
    %281 = vmatpush2.msra.mxu0 0.0
    %282 = vmatprep.subr.mxu0 0.0
    %283 = vmatpush2.msra.mxu0 0.0
    %284 = vmatprep.mubr.f32.mxu0 0.0
    %285 = vmatmul.mubr.f32.gmra.mxu0 %v138
    %v286 = vpop.f32.mrf.mxu0
    %v287 = vadd.f32 %v122, %v286
    %v288 = vpop.f32.mrf.mxu0
    %v289 = vadd.f32 %v126, %v288
    %290 = vmatprep.mubr.f32.mxu0 0.0
    %291 = vmatmul.mubr.f32.gmra.mxu0 %v141
    %v292 = vpop.f32.mrf.mxu0
    %v293 = vadd.f32 %v122, %v292
    %v294 = vpop.f32.mrf.mxu0
    %v295 = vadd.f32 %v126, %v294
    %296 = vdwg.mxu0
    %297 = vmatprep.subr.mxu0 0.0
    %298 = vmatpush1.msra.mxu0 0.0
    %299 = vmatprep.subr.mxu0 0.0
    %300 = vmatpush1.msra.mxu0 0.0
    %301 = vmatprep.subr.mxu0 0.0
    %302 = vmatpush1.msra.mxu0 0.0
    %303 = vmatprep.subr.mxu0 0.0
    %304 = vmatpush1.msra.mxu0 0.0
    %305 = vmatprep.subr.mxu0 0.0
    %306 = vmatpush1.msra.mxu0 0.0
    %307 = vmatprep.subr.mxu0 0.0
    %308 = vmatpush1.msra.mxu0 0.0
    %309 = vmatprep.subr.mxu0 0.0
    %310 = vmatpush1.msra.mxu0 0.0
    %311 = vmatprep.subr.mxu0 0.0
    %312 = vmatpush1.msra.mxu0 0.0
    %313 = vmatprep.subr.mxu0 0.0
    %314 = vmatpush1.msra.mxu0 0.0
    %315 = vmatprep.subr.mxu0 0.0
    %316 = vmatpush1.msra.mxu0 0.0
    %317 = vmatprep.subr.mxu0 0.0
    %318 = vmatpush1.msra.mxu0 0.0
    %319 = vmatprep.subr.mxu0 0.0
    %320 = vmatpush1.msra.mxu0 0.0
    %321 = vmatprep.subr.mxu0 0.0
    %322 = vmatpush1.msra.mxu0 %v108
    %323 = vmatprep.subr.mxu0 0.0
    %324 = vmatpush1.msra.mxu0 %v103
    %325 = vmatprep.subr.mxu0 0.0
    %326 = vmatpush1.msra.mxu0 %v98
    %327 = vmatprep.subr.mxu0 0.0
    %328 = vmatpush1.msra.mxu0 %v93
    %329 = vmatprep.subr.mxu0 0.0
    %330 = vmatpush2.msra.mxu0 0.0
    %331 = vmatprep.subr.mxu0 0.0
    %332 = vmatpush2.msra.mxu0 0.0
    %333 = vmatprep.subr.mxu0 0.0
    %334 = vmatpush2.msra.mxu0 0.0
    %335 = vmatprep.subr.mxu0 0.0
    %336 = vmatpush2.msra.mxu0 0.0
    %337 = vmatprep.subr.mxu0 0.0
    %338 = vmatpush2.msra.mxu0 0.0
    %339 = vmatprep.subr.mxu0 0.0
    %340 = vmatpush2.msra.mxu0 0.0
    %341 = vmatprep.subr.mxu0 0.0
    %342 = vmatpush2.msra.mxu0 0.0
    %343 = vmatprep.subr.mxu0 0.0
    %344 = vmatpush2.msra.mxu0 0.0
    %345 = vmatprep.subr.mxu0 0.0
    %346 = vmatpush2.msra.mxu0 0.0
    %347 = vmatprep.subr.mxu0 0.0
    %348 = vmatpush2.msra.mxu0 0.0
    %349 = vmatprep.subr.mxu0 0.0
    %350 = vmatpush2.msra.mxu0 0.0
    %351 = vmatprep.subr.mxu0 0.0
    %352 = vmatpush2.msra.mxu0 0.0
    %353 = vmatprep.subr.mxu0 0.0
    %354 = vmatpush2.msra.mxu0 0.0
    %355 = vmatprep.subr.mxu0 0.0
    %356 = vmatpush2.msra.mxu0 0.0
    %357 = vmatprep.subr.mxu0 0.0
    %358 = vmatpush2.msra.mxu0 0.0
    %359 = vmatprep.subr.mxu0 0.0
    %360 = vmatpush2.msra.mxu0 0.0
    %361 = vmatprep.mubr.f32.mxu0 0.0
    %362 = vmatmul.mubr.f32.gmra.mxu0 %v138
    %v363 = vpop.f32.mrf.mxu0
    %v364 = vadd.f32 %v130, %v363
    %v365 = vpop.f32.mrf.mxu0
    %366 = vmatprep.mubr.f32.mxu0 0.0
    %367 = vmatmul.mubr.f32.gmra.mxu0 %v141
    %v368 = vpop.f32.mrf.mxu0
    %v369 = vadd.f32 %v130, %v368
    %v370 = vpop.f32.mrf.mxu0
    %371 = vdwg.mxu0
    %v372 = vsel %vm136, %v364, -inf
    %373 = vmax.xlane.f32.xlu0 %v372
    %v374 = vpop.xlane.xlu0 %373
    %v375 = vsel %vm136, %v369, -inf
    %376 = vmax.xlane.f32.xlu0 %v375
    %v377 = vpop.xlane.xlu0 %376
    %v378 = vsub.f32 %v364, %v374
    %v379 = vsub.f32 %v369, %v377
    %v380 = vmul.f32 %v378, 1.442695
    %v381 = vpow.pop %v380
    %v382 = vmul.f32 %v379, 1.442695
    %v383 = vpow.pop %v382
    %v384 = vld [vmem:[#allocation8] sm:$0xff]
    %v385 = vld [vmem:[#allocation8 + $0x8] sm:$0xff]
    %v386 = vld [vmem:[#allocation8 + $0x10] sm:$0xff]
    %v387 = vld [vmem:[#allocation8 + $0x18] sm:$0xff]
    %v389 = vsel %vm136, %v381, 0
    %v392 = vsel %vm136, %v383, 0
    %394 = vmatprep.subr.mxu0 0.0
    %395 = vmatpush1.msra.mxu0 0.0
    %396 = vmatprep.subr.mxu0 0.0
    %397 = vmatpush1.msra.mxu0 0.0
    %398 = vmatprep.subr.mxu0 0.0
    %399 = vmatpush1.msra.mxu0 0.0
    %400 = vmatprep.subr.mxu0 0.0
    %401 = vmatpush1.msra.mxu0 0.0
    %402 = vmatprep.subr.mxu0 0.0
    %403 = vmatpush1.msra.mxu0 0.0
    %404 = vmatprep.subr.mxu0 0.0
    %405 = vmatpush1.msra.mxu0 0.0
    %406 = vmatprep.subr.mxu0 0.0
    %407 = vmatpush1.msra.mxu0 0.0
    %408 = vmatprep.subr.mxu0 0.0
    %409 = vmatpush1.msra.mxu0 0.0
    %410 = vmatprep.subr.mxu0 0.0
    %411 = vmatpush1.msra.mxu0 0.0
    %412 = vmatprep.subr.mxu0 0.0
    %413 = vmatpush1.msra.mxu0 0.0
    %414 = vmatprep.subr.mxu0 0.0
    %415 = vmatpush1.msra.mxu0 0.0
    %416 = vmatprep.subr.mxu0 0.0
    %417 = vmatpush1.msra.mxu0 0.0
    %418 = vmatprep.subr.mxu0 0.0
    %419 = vmatpush1.msra.mxu0 %v387
    %420 = vmatprep.subr.mxu0 0.0
    %421 = vmatpush1.msra.mxu0 %v386
    %422 = vmatprep.subr.mxu0 0.0
    %423 = vmatpush1.msra.mxu0 %v385
    %424 = vmatprep.subr.mxu0 0.0
    %425 = vmatpush1.msra.mxu0 %v384
    %426 = vmatprep.subr.mxu0 0.0
    %427 = vmatpush2.msra.mxu0 0.0
    %428 = vmatprep.subr.mxu0 0.0
    %429 = vmatpush2.msra.mxu0 0.0
    %430 = vmatprep.subr.mxu0 0.0
    %431 = vmatpush2.msra.mxu0 0.0
    %432 = vmatprep.subr.mxu0 0.0
    %433 = vmatpush2.msra.mxu0 0.0
    %434 = vmatprep.subr.mxu0 0.0
    %435 = vmatpush2.msra.mxu0 0.0
    %436 = vmatprep.subr.mxu0 0.0
    %437 = vmatpush2.msra.mxu0 0.0
    %438 = vmatprep.subr.mxu0 0.0
    %439 = vmatpush2.msra.mxu0 0.0
    %440 = vmatprep.subr.mxu0 0.0
    %441 = vmatpush2.msra.mxu0 0.0
    %442 = vmatprep.subr.mxu0 0.0
    %443 = vmatpush2.msra.mxu0 0.0
    %444 = vmatprep.subr.mxu0 0.0
    %445 = vmatpush2.msra.mxu0 0.0
    %446 = vmatprep.subr.mxu0 0.0
    %447 = vmatpush2.msra.mxu0 0.0
    %448 = vmatprep.subr.mxu0 0.0
    %449 = vmatpush2.msra.mxu0 0.0
    %450 = vmatprep.subr.mxu0 0.0
    %451 = vmatpush2.msra.mxu0 0.0
    %452 = vmatprep.subr.mxu0 0.0
    %453 = vmatpush2.msra.mxu0 0.0
    %454 = vmatprep.subr.mxu0 0.0
    %455 = vmatpush2.msra.mxu0 0.0
    %456 = vmatprep.subr.mxu0 0.0
    %457 = vmatpush2.msra.mxu0 0.0
    %458 = vmatprep.mubr.f32.mxu0 0.0
    %459 = vmatmul.mubr.f32.gmra.mxu0 %v389
    %v460 = vpop.f32.mrf.mxu0
    %v461 = vadd.f32 0.0, %v460
    %v462 = vpop.f32.mrf.mxu0
    %463 = vmatprep.mubr.f32.mxu0 0.0
    %464 = vmatmul.mubr.f32.gmra.mxu0 %v392
    %v465 = vpop.f32.mrf.mxu0
    %v466 = vadd.f32 0.0, %v465
    %v467 = vpop.f32.mrf.mxu0
    %468 = vdwg.mxu0
    %v469 = vrcp.pop %v461
    %v470 = vmul.f32 %v381, %v469
    %v471 = vrcp.pop %v466
    %v472 = vmul.f32 %v383, %v471
    %v473 = vld [vmem:[#allocation10] sm:$0xff]
    %v474 = vld [vmem:[#allocation10 + $0x8] sm:$0xff]
    %v475 = vld [vmem:[#allocation10 + $0x10] sm:$0xff]
    %v476 = vld [vmem:[#allocation10 + $0x18] sm:$0xff]
    %v477 = vld [vmem:[#allocation10 + $0x20] sm:$0xff]
    %v478 = vld [vmem:[#allocation10 + $0x28] sm:$0xff]
    %v479 = vld [vmem:[#allocation10 + $0x30] sm:$0xff]
    %v480 = vld [vmem:[#allocation10 + $0x38] sm:$0xff]
    %v481 = vld [vmem:[#allocation10 + $0x40] sm:$0xff]
    %v482 = vld [vmem:[#allocation10 + $0x48] sm:$0xff]
    %v483 = vld [vmem:[#allocation10 + $0x50] sm:$0xff]
    %v484 = vld [vmem:[#allocation10 + $0x58] sm:$0xff]
    %v485 = vld [vmem:[#allocation10 + $0x60] sm:$0xff]
    %v486 = vld [vmem:[#allocation10 + $0x68] sm:$0xff]
    %v487 = vld [vmem:[#allocation10 + $0x70] sm:$0xff]
    %v488 = vld [vmem:[#allocation10 + $0x78] sm:$0xff]
    %v490 = vsel %vm136, %v470, 0
    %v493 = vsel %vm136, %v472, 0
    %495 = vmatprep.subr.mxu0 0.0
    %496 = vmatpush1.msra.mxu0 0.0
    %497 = vmatprep.subr.mxu0 0.0
    %498 = vmatpush1.msra.mxu0 0.0
    %499 = vmatprep.subr.mxu0 0.0
    %500 = vmatpush1.msra.mxu0 0.0
    %501 = vmatprep.subr.mxu0 0.0
    %502 = vmatpush1.msra.mxu0 0.0
    %503 = vmatprep.subr.mxu0 0.0
    %504 = vmatpush1.msra.mxu0 0.0
    %505 = vmatprep.subr.mxu0 0.0
    %506 = vmatpush1.msra.mxu0 0.0
    %507 = vmatprep.subr.mxu0 0.0
    %508 = vmatpush1.msra.mxu0 0.0
    %509 = vmatprep.subr.mxu0 0.0
    %510 = vmatpush1.msra.mxu0 0.0
    %511 = vmatprep.subr.mxu0 0.0
    %512 = vmatpush1.msra.mxu0 0.0
    %513 = vmatprep.subr.mxu0 0.0
    %514 = vmatpush1.msra.mxu0 0.0
    %515 = vmatprep.subr.mxu0 0.0
    %516 = vmatpush1.msra.mxu0 0.0
    %517 = vmatprep.subr.mxu0 0.0
    %518 = vmatpush1.msra.mxu0 0.0
    %519 = vmatprep.subr.mxu0 %v486
    %520 = vmatpush1.msra.mxu0 %v485
    %521 = vmatprep.subr.mxu0 %v482
    %522 = vmatpush1.msra.mxu0 %v481
    %523 = vmatprep.subr.mxu0 %v478
    %524 = vmatpush1.msra.mxu0 %v477
    %525 = vmatprep.subr.mxu0 %v474
    %526 = vmatpush1.msra.mxu0 %v473
    %527 = vmatprep.subr.mxu0 0.0
    %528 = vmatpush2.msra.mxu0 0.0
    %529 = vmatprep.subr.mxu0 0.0
    %530 = vmatpush2.msra.mxu0 0.0
    %531 = vmatprep.subr.mxu0 0.0
    %532 = vmatpush2.msra.mxu0 0.0
    %533 = vmatprep.subr.mxu0 0.0
    %534 = vmatpush2.msra.mxu0 0.0
    %535 = vmatprep.subr.mxu0 0.0
    %536 = vmatpush2.msra.mxu0 0.0
    %537 = vmatprep.subr.mxu0 0.0
    %538 = vmatpush2.msra.mxu0 0.0
    %539 = vmatprep.subr.mxu0 0.0
    %540 = vmatpush2.msra.mxu0 0.0
    %541 = vmatprep.subr.mxu0 0.0
    %542 = vmatpush2.msra.mxu0 0.0
    %543 = vmatprep.subr.mxu0 0.0
    %544 = vmatpush2.msra.mxu0 0.0
    %545 = vmatprep.subr.mxu0 0.0
    %546 = vmatpush2.msra.mxu0 0.0
    %547 = vmatprep.subr.mxu0 0.0
    %548 = vmatpush2.msra.mxu0 0.0
    %549 = vmatprep.subr.mxu0 0.0
    %550 = vmatpush2.msra.mxu0 0.0
    %551 = vmatprep.subr.mxu0 0.0
    %552 = vmatpush2.msra.mxu0 0.0
    %553 = vmatprep.subr.mxu0 0.0
    %554 = vmatpush2.msra.mxu0 0.0
    %555 = vmatprep.subr.mxu0 0.0
    %556 = vmatpush2.msra.mxu0 0.0
    %557 = vmatprep.subr.mxu0 0.0
    %558 = vmatpush2.msra.mxu0 0.0
    %559 = vmatprep.mubr.f32.mxu0 0.0
    %560 = vmatmul.mubr.f32.gmra.mxu0 %v490
    %v561 = vpop.f32.mrf.mxu0
    %v562 = vadd.f32 0.0, %v561
    %v563 = vpop.f32.mrf.mxu0
    %v564 = vadd.f32 0.0, %v563
    %565 = vmatprep.mubr.f32.mxu0 0.0
    %566 = vmatmul.mubr.f32.gmra.mxu0 %v493
    %v567 = vpop.f32.mrf.mxu0
    %v568 = vadd.f32 0.0, %v567
    %v569 = vpop.f32.mrf.mxu0
    %v570 = vadd.f32 0.0, %v569
    %571 = vdwg.mxu0
    %572 = vmatprep.subr.mxu0 0.0
    %573 = vmatpush1.msra.mxu0 0.0
    %574 = vmatprep.subr.mxu0 0.0
    %575 = vmatpush1.msra.mxu0 0.0
    %576 = vmatprep.subr.mxu0 0.0
    %577 = vmatpush1.msra.mxu0 0.0
    %578 = vmatprep.subr.mxu0 0.0
    %579 = vmatpush1.msra.mxu0 0.0
    %580 = vmatprep.subr.mxu0 0.0
    %581 = vmatpush1.msra.mxu0 0.0
    %582 = vmatprep.subr.mxu0 0.0
    %583 = vmatpush1.msra.mxu0 0.0
    %584 = vmatprep.subr.mxu0 0.0
    %585 = vmatpush1.msra.mxu0 0.0
    %586 = vmatprep.subr.mxu0 0.0
    %587 = vmatpush1.msra.mxu0 0.0
    %588 = vmatprep.subr.mxu0 0.0
    %589 = vmatpush1.msra.mxu0 0.0
    %590 = vmatprep.subr.mxu0 0.0
    %591 = vmatpush1.msra.mxu0 0.0
    %592 = vmatprep.subr.mxu0 0.0
    %593 = vmatpush1.msra.mxu0 0.0
    %594 = vmatprep.subr.mxu0 0.0
    %595 = vmatpush1.msra.mxu0 0.0
    %596 = vmatprep.subr.mxu0 %v488
    %597 = vmatpush1.msra.mxu0 %v487
    %598 = vmatprep.subr.mxu0 %v484
    %599 = vmatpush1.msra.mxu0 %v483
    %600 = vmatprep.subr.mxu0 %v480
    %601 = vmatpush1.msra.mxu0 %v479
    %602 = vmatprep.subr.mxu0 %v476
    %603 = vmatpush1.msra.mxu0 %v475
    %604 = vmatprep.subr.mxu0 0.0
    %605 = vmatpush2.msra.mxu0 0.0
    %606 = vmatprep.subr.mxu0 0.0
    %607 = vmatpush2.msra.mxu0 0.0
    %608 = vmatprep.subr.mxu0 0.0
    %609 = vmatpush2.msra.mxu0 0.0
    %610 = vmatprep.subr.mxu0 0.0
    %611 = vmatpush2.msra.mxu0 0.0
    %612 = vmatprep.subr.mxu0 0.0
    %613 = vmatpush2.msra.mxu0 0.0
    %614 = vmatprep.subr.mxu0 0.0
    %615 = vmatpush2.msra.mxu0 0.0
    %616 = vmatprep.subr.mxu0 0.0
    %617 = vmatpush2.msra.mxu0 0.0
    %618 = vmatprep.subr.mxu0 0.0
    %619 = vmatpush2.msra.mxu0 0.0
    %620 = vmatprep.subr.mxu0 0.0
    %621 = vmatpush2.msra.mxu0 0.0
    %622 = vmatprep.subr.mxu0 0.0
    %623 = vmatpush2.msra.mxu0 0.0
    %624 = vmatprep.subr.mxu0 0.0
    %625 = vmatpush2.msra.mxu0 0.0
    %626 = vmatprep.subr.mxu0 0.0
    %627 = vmatpush2.msra.mxu0 0.0
    %628 = vmatprep.subr.mxu0 0.0
    %629 = vmatpush2.msra.mxu0 0.0
    %630 = vmatprep.subr.mxu0 0.0
    %631 = vmatpush2.msra.mxu0 0.0
    %632 = vmatprep.subr.mxu0 0.0
    %633 = vmatpush2.msra.mxu0 0.0
    %634 = vmatprep.subr.mxu0 0.0
    %635 = vmatpush2.msra.mxu0 0.0
    %636 = vmatprep.mubr.f32.mxu0 0.0
    %637 = vmatmul.mubr.f32.gmra.mxu0 %v490
    %v638 = vpop.f32.mrf.mxu0
    %v639 = vadd.f32 0.0, %v638
    %v640 = vpop.f32.mrf.mxu0
    %v641 = vadd.f32 0.0, %v640
    %642 = vmatprep.mubr.f32.mxu0 0.0
    %643 = vmatmul.mubr.f32.gmra.mxu0 %v493
    %v644 = vpop.f32.mrf.mxu0
    %v645 = vadd.f32 0.0, %v644
    %v646 = vpop.f32.mrf.mxu0
    %v647 = vadd.f32 0.0, %v646
    %648 = vdwg.mxu0
    %v649 = vmul.f32 %v562, %v210
    %v650 = vmul.f32 %v568, %v216
    %v651 = vadd.f32 %v649, 0.0
    %v652 = vadd.f32 %v650, 0.0
    %v653 = vmul.f32 %v564, %v212
    %v654 = vmul.f32 %v570, %v218
    %v655 = vadd.f32 %v651, %v653
    %v656 = vadd.f32 %v652, %v654
    %v657 = vmul.f32 %v639, %v287
    %v658 = vmul.f32 %v645, %v293
    %v659 = vadd.f32 %v655, %v657
    %v660 = vadd.f32 %v656, %v658
    %v661 = vmul.f32 %v641, %v289
    %v662 = vmul.f32 %v647, %v295
    %v663 = vadd.f32 %v659, %v661
    %v664 = vadd.f32 %v660, %v662
    %665 = vst [vmem:[#allocation11] sm:$0xff] %v663
    %666 = vst [vmem:[#allocation11 + $0x8] sm:$0xff] %v664
    // Predicated region
    $region42: #{tpu_custom_call.1} parent=1 // pred_check
      _
    $region43: #{tpu_custom_call.1} parent=1 // pred_check_branch
      %668 = sbr.rel (0) target = $region45
    $region44: #{tpu_custom_call.1} parent=1 // pred_region
      %s670 = ssub.s32 256, 256
      %671 = vsyncadd [#allocation4], %s670
      %s672 = sshll.u32 [#allocation11], 4
      %s673 = int_to_ptr.vmem [resolvable:$true] %s672
      %678 = dma.vmem_to_hbm [thread:$0]  %s673, 256, %s5, [#allocation4], 128, 128, 8
    $region45: #{tpu_custom_call.1} parent=1 // pred_fallthru
      _
    // Predicated region
    $region46: #{tpu_custom_call.1} parent=1 // pred_check
      _
    $region47: #{tpu_custom_call.1} parent=1 // pred_check_branch
      %680 = sbr.rel (0) target = $region49
    $region48: #{tpu_custom_call.1} parent=1 // pred_region
      %681 = dma.done [#allocation4], 256
    $region49: #{tpu_custom_call.1} parent=1 // pred_fallthru
      _
    %682 = vsyncpa [#allocation3], 1
    %683 = vsyncpa [#allocation6], 1
    %684 = vsyncpa [#allocation9], 1
    %685 = vsyncpa [#allocation4], 1

</llo_original>
